<compile_context>
chip_gen: v7x
topology: tpu7x:2x2x1
jax: 0.10.0
libtpu: 0.0.40
codegen_flags: <defaults>
</compile_context>

<pallas_src>
import jax
import jax.numpy as jnp
from jax import lax
from jax.experimental import pallas as pl
from jax.experimental.pallas import tpu as pltpu

HIDDEN_DIM = 128  # config.hidden_dim


def _vmem_spec():
    # Whole array resident in VMEM, no blocking (shapes are tiny).
    return pl.BlockSpec(memory_space=pltpu.MemorySpace.VMEM)


# --------------------------------------------------------------------------
# Kernel 1: decode-step-invariant feature projection
#   encoder_feature = encoder_outputs.view(-1, n) @ Wf^T
# --------------------------------------------------------------------------
def encoder_feature_kernel(enc_ref, wf_ref, feat_ref):
    b, t_k, n = enc_ref.shape
    enc2d = enc_ref[...].astype(jnp.float32).reshape(b * t_k, n)
    # x @ Wf^T without materializing a transpose: contract axis 1 of both.
    feat = lax.dot_general(
        enc2d, wf_ref[...].astype(jnp.float32),
        dimension_numbers=(((1,), (1,)), ((), ())),
        preferred_element_type=jnp.float32)                      # (b*t_k, n)
    feat_ref[...] = feat.reshape(b, t_k, n)


def precompute_encoder_feature(encoder_outputs, wf):
    b, t_k, n = encoder_outputs.shape
    return pl.pallas_call(
        encoder_feature_kernel,
        out_shape=jax.ShapeDtypeStruct((b, t_k, n), jnp.float32),
        in_specs=[_vmem_spec(), _vmem_spec()],
        out_specs=_vmem_spec(),
    )(encoder_outputs, wf)


# --------------------------------------------------------------------------
# Kernel 2: per-decode-step attention
#   dec_fea = s_t_hat @ Wd^T ; e = tanh(enc_feat + dec_fea)
#   scores = e . v ; attn = masked softmax (folded renorm)
#   c_t = attn @ encoder_outputs
# --------------------------------------------------------------------------
def attention_step_kernel(enc_ref, feat_ref, s_ref, mask_ref, wd_ref, v_ref,
                          ct_ref):
    b, t_k, n = enc_ref.shape
    enc = enc_ref[...].astype(jnp.float32)                       # (b, t_k, n)
    enc_feat = feat_ref[...]                                     # (b, t_k, n)

    # decode_proj: s_t_hat @ Wd^T, contracting axis 1 of both (no transpose).
    dec_fea = lax.dot_general(
        s_ref[...].astype(jnp.float32), wd_ref[...].astype(jnp.float32),
        dimension_numbers=(((1,), (1,)), ((), ())),
        preferred_element_type=jnp.float32)                      # (b, n)

    e = jnp.tanh(enc_feat + dec_fea[:, None, :])                 # (b, t_k, n)

    # v projection: width-1 output -> VPU multiply + lane reduce (no MXU).
    scores = jnp.sum(e * v_ref[...].astype(jnp.float32), axis=-1)  # (b, t_k)

    # Masked softmax with folded renormalization (denominators cancel).
    m = jnp.max(scores, axis=1, keepdims=True)
    w = jnp.exp(scores - m) * mask_ref[...].astype(jnp.float32)
    attn = w / jnp.sum(w, axis=1, keepdims=True)                 # (b, t_k)

    # c_t = bmm(attn (b,1,t_k), encoder_outputs (b,t_k,n)) on the MXU.
    c_t = jnp.einsum('bqt,btn->bqn', attn[:, None, :], enc,
                     preferred_element_type=jnp.float32)         # (b, 1, n)
    ct_ref[...] = c_t[:, 0, :].astype(ct_ref.dtype)


def attention_inter_step(s_t_hat, encoder_outputs, encoder_feature,
                         enc_padding_mask, wd, v):
    b, t_k, n = encoder_outputs.shape
    mask = enc_padding_mask[:, :t_k]
    return pl.pallas_call(
        attention_step_kernel,
        out_shape=jax.ShapeDtypeStruct((b, n), encoder_outputs.dtype),
        in_specs=[_vmem_spec()] * 6,
        out_specs=_vmem_spec(),
    )(encoder_outputs, encoder_feature, s_t_hat, mask, wd, v)


def attention_inter(s_t_hat, encoder_outputs, enc_padding_mask, wf, wd, v):
    """Full module forward (projection + step), matching the PyTorch module."""
    enc_feat = precompute_encoder_feature(encoder_outputs, wf)
    return attention_inter_step(s_t_hat, encoder_outputs, enc_feat,
                                enc_padding_mask, wd, v)


def attention_inter_ref(s_t_hat, encoder_outputs, enc_padding_mask, wf, wd, v):
    """Pure-JAX reference reproducing the PyTorch forward."""
    b, t_k, n = encoder_outputs.shape
    enc_feat = encoder_outputs.reshape(-1, n) @ wf.T
    dec_fea = s_t_hat @ wd.T
    dec_exp = jnp.broadcast_to(dec_fea[:, None, :], (b, t_k, n)).reshape(-1, n)
    e = jnp.tanh(enc_feat + dec_exp)
    scores = (e @ v.T).reshape(b, t_k)
    attn_ = jax.nn.softmax(scores, axis=1) * enc_padding_mask[:, :t_k]
    attn = attn_ / jnp.sum(attn_, axis=1, keepdims=True)
    c_t = jnp.einsum("bt,btn->bn", attn, encoder_outputs)
    return c_t


if __name__ == "__main__":
    B, T_K, N = 2, 16, HIDDEN_DIM

    key = jax.random.PRNGKey(0)
    k1, k2, k3, k4, k5, k6 = jax.random.split(key, 6)

    # Module parameters (deterministic synthetic init, PyTorch (out,in) layout)
    wf = jax.random.normal(k1, (N, N), jnp.float32) * 0.05      # feature_proj
    wd = jax.random.normal(k2, (N, 2 * N), jnp.float32) * 0.05  # decode_proj
    v = jax.random.normal(k3, (1, N), jnp.float32) * 0.05       # v

    # Inputs
    encoder_outputs = jax.random.normal(k4, (B, T_K, N), jnp.float32)
    lengths = jnp.array([T_K, T_K - 5], jnp.int32)
    enc_padding_mask = (jnp.arange(T_K)[None, :] < lengths[:, None]).astype(
        jnp.float32)

    # enc_feat is decode-step invariant: compute once, reuse across steps.
    enc_feat = jax.block_until_ready(
        precompute_encoder_feature(encoder_outputs, wf))

    # Simulate several decode steps reusing the precomputed feature projection.
    for step in range(3):
        s_t_hat = jax.random.normal(jax.random.fold_in(k5, step),
                                    (B, 2 * N), jnp.float32)
        c_t = attention_inter_step(s_t_hat, encoder_outputs, enc_feat,
                                   enc_padding_mask, wd, v)
        c_t = jax.block_until_ready(c_t)
        c_t_ref = attention_inter_ref(s_t_hat, encoder_outputs,
                                      enc_padding_mask, wf, wd, v)
        assert c_t.shape == (B, N)
        assert jnp.allclose(c_t, c_t_ref, atol=1e-5, rtol=1e-5)

    # Also exercise the composed full forward once (projection + step).
    s_t_hat = jax.random.normal(k6, (B, 2 * N), jnp.float32)
    c_t = jax.block_until_ready(
        attention_inter(s_t_hat, encoder_outputs, enc_padding_mask, wf, wd, v))
    c_t_ref = attention_inter_ref(s_t_hat, encoder_outputs, enc_padding_mask,
                                  wf, wd, v)
    assert c_t.shape == (B, N)
    assert jnp.allclose(c_t, c_t_ref, atol=1e-5, rtol=1e-5)

    print("KERNEL_OK")
</pallas_src>

<mosaic_0001>
module attributes {stable_mosaic.version = 11 : i64} {
  func.func @encoder_feature_kernel(%arg0: memref<2x16x128xf32, #tpu.memory_space<vmem>>, %arg1: memref<128x128xf32, #tpu.memory_space<vmem>>, %arg2: memref<2x16x128xf32, #tpu.memory_space<vmem>>) attributes {dimension_semantics = [], scalar_prefetch = 0 : i64, scratch_operands = 0 : i64, tpu.core_type = #tpu.core_type<tc>} {
    %c0 = arith.constant 0 : index
    %c0_0 = arith.constant 0 : index
    %c0_1 = arith.constant 0 : index
    %0 = vector.load %arg0[%c0, %c0_0, %c0_1] : memref<2x16x128xf32, #tpu.memory_space<vmem>>, vector<2x16x128xf32>
    %1 = vector.shape_cast %0 : vector<2x16x128xf32> to vector<32x128xf32>
    %c0_2 = arith.constant 0 : index
    %c0_3 = arith.constant 0 : index
    %2 = vector.load %arg1[%c0_2, %c0_3] : memref<128x128xf32, #tpu.memory_space<vmem>>, vector<128x128xf32>
    %cst = arith.constant dense<0.000000e+00> : vector<32x128xf32>
    %3 = tpu.matmul %1, %2, %cst {dimension_numbers = #tpu.dot_dimension_numbers<[1], [1], [0], [0], [0, 0, 1, 0], [], []>} : vector<32x128xf32>, vector<128x128xf32>, vector<32x128xf32> -> vector<32x128xf32>
    %4 = vector.shape_cast %3 : vector<32x128xf32> to vector<2x16x128xf32>
    %c0_4 = arith.constant 0 : index
    %c0_5 = arith.constant 0 : index
    %c0_6 = arith.constant 0 : index
    %5 = vector.load %arg2[%c0_4, %c0_5, %c0_6] : memref<2x16x128xf32, #tpu.memory_space<vmem>>, vector<2x16x128xf32>
    tpu.vector_store %arg2[%c0_4, %c0_5, %c0_6], %4 {strides = array<i32>} : memref<2x16x128xf32, #tpu.memory_space<vmem>>, vector<2x16x128xf32>,
    return
  }
}

</mosaic_0001>

<llo_original>
// kernel: tpu_custom_call.1
$region0: #{tpu_custom_call.1}
  #allocation0 [shape = 'u32[]', space=smem, size = 0x4, offset = 0x4, fixed_abs, tag = 'smem constant byte address 0x4 - core index']
  #allocation1 [shape = 'u32[144,128]{1,0:T(1,128)}', space=vmem, size = 0x12000, scoped, tag = 'internal scratch']
  %s0 = inlined_call_operand.hbm [shape: f32[2,16,128], index: 0, kind: input, shape index: {}]
  %s1 = inlined_call_operand.hbm [shape: f32[128,128], index: 1, kind: input, shape index: {}]
  %s2 = inlined_call_operand.hbm [shape: f32[2,16,128], index: 2, kind: output, shape index: {}]
  %s3 = sld [smem:[#allocation0]]
  $region26: #{tpu_custom_call.1} parent=0
    _
  %s5 = ssub.s32 1, %s3
  %s6 = scalar_select 0, %s5, %s3
  $region1: #{tpu_custom_call.1} parent=0
    #allocation2 [shape = 'u8[16384]{0}', space=vmem, size = 0x4000, scoped, tag = 'input window, operand 0, single buffered']
    #allocation3 [shape = 's32[1]{0}', space=sflag, size = 0x4, scoped, tag = 'scoped memory for tpu_custom_call.1']
    #allocation4 [shape = 's32[1]{0}', space=sflag, size = 0x4, scoped, tag = 'scoped memory for tpu_custom_call.1']
    #allocation5 [shape = 'u8[65536]{0}', space=vmem, size = 0x10000, scoped, tag = 'input window, operand 1, single buffered']
    #allocation6 [shape = 's32[1]{0}', space=sflag, size = 0x4, scoped, tag = 'scoped memory for tpu_custom_call.1']
    #allocation7 [shape = 'u8[16384]{0}', space=vmem, size = 0x4000, scoped, tag = 'output window, operand 0, single buffered']
    %7 = vsyncpa [#allocation3], 0
    %8 = vsyncpa [#allocation6], 0
    %9 = vsyncpa [#allocation4], 0
    // Predicated region
    $region2: #{tpu_custom_call.1} parent=1 // pred_check
      _
    $region3: #{tpu_custom_call.1} parent=1 // pred_check_branch
      %11 = sbr.rel (0) target = $region5
    $region4: #{tpu_custom_call.1} parent=1 // pred_region
      %s13 = ssub.s32 512, 512
      %14 = vsyncadd [#allocation3], %s13
      %s15 = sshll.u32 [#allocation2], 4
      %s16 = int_to_ptr.vmem [resolvable:$true] %s15
      %21 = dma.hbm_to_vmem [thread:$0]  %s0, 512, %s16, [#allocation3], 128, 128, 8
    $region5: #{tpu_custom_call.1} parent=1 // pred_fallthru
      _
    // Predicated region
    $region6: #{tpu_custom_call.1} parent=1 // pred_check
      _
    $region7: #{tpu_custom_call.1} parent=1 // pred_check_branch
      %23 = sbr.rel (0) target = $region9
    $region8: #{tpu_custom_call.1} parent=1 // pred_region
      %s25 = ssub.s32 2048, 2048
      %26 = vsyncadd [#allocation6], %s25
      %s27 = sshll.u32 [#allocation5], 4
      %s28 = int_to_ptr.vmem [resolvable:$true] %s27
      %33 = dma.hbm_to_vmem [thread:$0]  %s1, 2048, %s28, [#allocation6], 128, 128, 8
    $region9: #{tpu_custom_call.1} parent=1 // pred_fallthru
      _
    // Predicated region
    $region10: #{tpu_custom_call.1} parent=1 // pred_check
      _
    $region11: #{tpu_custom_call.1} parent=1 // pred_check_branch
      %35 = sbr.rel (0) target = $region13
    $region12: #{tpu_custom_call.1} parent=1 // pred_region
      %36 = dma.done [#allocation3], 512
    $region13: #{tpu_custom_call.1} parent=1 // pred_fallthru
      _
    // Predicated region
    $region14: #{tpu_custom_call.1} parent=1 // pred_check
      _
    $region15: #{tpu_custom_call.1} parent=1 // pred_check_branch
      %38 = sbr.rel (0) target = $region17
    $region16: #{tpu_custom_call.1} parent=1 // pred_region
      %39 = dma.done [#allocation6], 2048
    $region17: #{tpu_custom_call.1} parent=1 // pred_fallthru
      _
    %v40 = vld [vmem:[#allocation2] sm:$0xff]
    %v41 = vld [vmem:[#allocation2 + $0x8] sm:$0xff]
    %v42 = vld [vmem:[#allocation2 + $0x10] sm:$0xff]
    %v43 = vld [vmem:[#allocation2 + $0x18] sm:$0xff]
    %v44 = vld [vmem:[#allocation5] sm:$0xff]
    %v45 = vld [vmem:[#allocation5 + $0x8] sm:$0xff]
    %v46 = vld [vmem:[#allocation5 + $0x10] sm:$0xff]
    %v47 = vld [vmem:[#allocation5 + $0x18] sm:$0xff]
    %v48 = vld [vmem:[#allocation5 + $0x20] sm:$0xff]
    %v49 = vld [vmem:[#allocation5 + $0x28] sm:$0xff]
    %v50 = vld [vmem:[#allocation5 + $0x30] sm:$0xff]
    %v51 = vld [vmem:[#allocation5 + $0x38] sm:$0xff]
    %v52 = vld [vmem:[#allocation5 + $0x40] sm:$0xff]
    %v53 = vld [vmem:[#allocation5 + $0x48] sm:$0xff]
    %v54 = vld [vmem:[#allocation5 + $0x50] sm:$0xff]
    %v55 = vld [vmem:[#allocation5 + $0x58] sm:$0xff]
    %v56 = vld [vmem:[#allocation5 + $0x60] sm:$0xff]
    %v57 = vld [vmem:[#allocation5 + $0x68] sm:$0xff]
    %v58 = vld [vmem:[#allocation5 + $0x70] sm:$0xff]
    %v59 = vld [vmem:[#allocation5 + $0x78] sm:$0xff]
    %60 = vmatprep.subr.mxu0 0.0
    %61 = vmatpush1.xpose.msra.mxu0 %v44
    %62 = vmatprep.subr.mxu0 0.0
    %63 = vmatpush1.xpose.msra.mxu0 %v45
    %64 = vmatprep.subr.mxu0 0.0
    %65 = vmatpush1.xpose.msra.mxu0 %v46
    %66 = vmatprep.subr.mxu0 0.0
    %67 = vmatpush1.xpose.msra.mxu0 %v47
    %68 = vmatprep.subr.mxu0 0.0
    %69 = vmatpush1.xpose.msra.mxu0 %v48
    %70 = vmatprep.subr.mxu0 0.0
    %71 = vmatpush1.xpose.msra.mxu0 %v49
    %72 = vmatprep.subr.mxu0 0.0
    %73 = vmatpush1.xpose.msra.mxu0 %v50
    %74 = vmatprep.subr.mxu0 0.0
    %75 = vmatpush1.xpose.msra.mxu0 %v51
    %76 = vmatprep.subr.mxu0 0.0
    %77 = vmatpush1.xpose.msra.mxu0 %v52
    %78 = vmatprep.subr.mxu0 0.0
    %79 = vmatpush1.xpose.msra.mxu0 %v53
    %80 = vmatprep.subr.mxu0 0.0
    %81 = vmatpush1.xpose.msra.mxu0 %v54
    %82 = vmatprep.subr.mxu0 0.0
    %83 = vmatpush1.xpose.msra.mxu0 %v55
    %84 = vmatprep.subr.mxu0 0.0
    %85 = vmatpush1.xpose.msra.mxu0 %v56
    %86 = vmatprep.subr.mxu0 0.0
    %87 = vmatpush1.xpose.msra.mxu0 %v57
    %88 = vmatprep.subr.mxu0 0.0
    %89 = vmatpush1.xpose.msra.mxu0 %v58
    %90 = vmatprep.subr.mxu0 0.0
    %91 = vmatpush1.xpose.msra.mxu0 %v59
    %92 = vmatprep.subr.mxu0 0.0
    %93 = vmatpush1.xpose.msra.mxu0 0.0
    %94 = vmatprep.subr.mxu0 0.0
    %95 = vmatpush1.xpose.msra.mxu0 0.0
    %96 = vmatprep.subr.mxu0 0.0
    %97 = vmatpush1.xpose.msra.mxu0 0.0
    %98 = vmatprep.subr.mxu0 0.0
    %99 = vmatpush1.xpose.msra.mxu0 0.0
    %100 = vmatprep.subr.mxu0 0.0
    %101 = vmatpush1.xpose.msra.mxu0 0.0
    %102 = vmatprep.subr.mxu0 0.0
    %103 = vmatpush1.xpose.msra.mxu0 0.0
    %104 = vmatprep.subr.mxu0 0.0
    %105 = vmatpush1.xpose.msra.mxu0 0.0
    %106 = vmatprep.subr.mxu0 0.0
    %107 = vmatpush1.xpose.msra.mxu0 0.0
    %108 = vmatprep.subr.mxu0 0.0
    %109 = vmatpush1.xpose.msra.mxu0 0.0
    %110 = vmatprep.subr.mxu0 0.0
    %111 = vmatpush1.xpose.msra.mxu0 0.0
    %112 = vmatprep.subr.mxu0 0.0
    %113 = vmatpush1.xpose.msra.mxu0 0.0
    %114 = vmatprep.subr.mxu0 0.0
    %115 = vmatpush1.xpose.msra.mxu0 0.0
    %116 = vmatprep.subr.mxu0 0.0
    %117 = vmatpush1.xpose.msra.mxu0 0.0
    %118 = vmatprep.subr.mxu0 0.0
    %119 = vmatpush1.xpose.msra.mxu0 0.0
    %120 = vmatprep.subr.mxu0 0.0
    %121 = vmatpush1.xpose.msra.mxu0 0.0
    %122 = vmatprep.subr.mxu0 0.0
    %123 = vmatpush1.xpose.msra.mxu0 0.0
    %124 = vmatprep.mubr.f32.mxu0 0.0
    %125 = vmatmul.mubr.f32.gmra.mrb[0].mxu0 %v40
    %v126 = vpop.f32.mrb[0].mxu0
    %v127 = vadd.f32 0.0, %v126
    %v128 = vpop.f32.mrb[0].mxu0
    %129 = vmatprep.mubr.f32.mxu0 0.0
    %130 = vmatmul.mubr.f32.gmra.mrb[0].mxu0 %v41
    %v131 = vpop.f32.mrb[0].mxu0
    %v132 = vadd.f32 0.0, %v131
    %v133 = vpop.f32.mrb[0].mxu0
    %134 = vmatprep.mubr.f32.mxu0 0.0
    %135 = vmatmul.mubr.f32.gmra.mrb[0].mxu0 %v42
    %v136 = vpop.f32.mrb[0].mxu0
    %v137 = vadd.f32 0.0, %v136
    %v138 = vpop.f32.mrb[0].mxu0
    %139 = vmatprep.mubr.f32.mxu0 0.0
    %140 = vmatmul.mubr.f32.gmra.mrb[0].mxu0 %v43
    %v141 = vpop.f32.mrb[0].mxu0
    %v142 = vadd.f32 0.0, %v141
    %v143 = vpop.f32.mrb[0].mxu0
    %144 = vdwg.mxu0
    %145 = vst [vmem:[#allocation7] sm:$0xff] %v127
    %146 = vst [vmem:[#allocation7 + $0x8] sm:$0xff] %v132
    %147 = vst [vmem:[#allocation7 + $0x10] sm:$0xff] %v137
    %148 = vst [vmem:[#allocation7 + $0x18] sm:$0xff] %v142
    // Predicated region
    $region18: #{tpu_custom_call.1} parent=1 // pred_check
      _
    $region19: #{tpu_custom_call.1} parent=1 // pred_check_branch
      %150 = sbr.rel (0) target = $region21
    $region20: #{tpu_custom_call.1} parent=1 // pred_region
      %s152 = ssub.s32 512, 512
      %153 = vsyncadd [#allocation4], %s152
      %s154 = sshll.u32 [#allocation7], 4
      %s155 = int_to_ptr.vmem [resolvable:$true] %s154
      %160 = dma.vmem_to_hbm [thread:$0]  %s155, 512, %s2, [#allocation4], 128, 128, 8
    $region21: #{tpu_custom_call.1} parent=1 // pred_fallthru
      _
    // Predicated region
    $region22: #{tpu_custom_call.1} parent=1 // pred_check
      _
    $region23: #{tpu_custom_call.1} parent=1 // pred_check_branch
      %162 = sbr.rel (0) target = $region25
    $region24: #{tpu_custom_call.1} parent=1 // pred_region
      %163 = dma.done [#allocation4], 512
    $region25: #{tpu_custom_call.1} parent=1 // pred_fallthru
      _
    %164 = vsyncpa [#allocation3], 1
    %165 = vsyncpa [#allocation6], 1
    %166 = vsyncpa [#allocation4], 1

</llo_original>
